<compile_context>
chip_gen: v7x
topology: tpu7x:2x2x1
jax: 0.10.0
libtpu: 0.0.40
codegen_flags: <defaults>
</compile_context>

<pallas_src>
import jax
import jax.numpy as jnp
from jax.experimental import pallas as pl
from jax.experimental.pallas import tpu as pltpu


def downsample_a_kernel(x_ref, s_ref, o_ref):
    # x_ref: (Nb, C*Ho, 2*W)    row (c*Ho + ho) = [x[c, 2ho, :], x[c, 2ho+1, :]]
    # s_ref: (2*W, Wo)          0/1 selection matrix, S[2j, j] = 1
    # o_ref: (Nb, 2, C*Ho, Wo)  half 0 = subsample, half 1 = zeros
    nb = x_ref.shape[0]
    sel = s_ref[...]

    # Zero half: one full-slab store.
    o_ref[:, 1, :, :] = jnp.zeros(
        (nb, o_ref.shape[2], o_ref.shape[3]), dtype=o_ref.dtype)

    # Subsample half: one MXU matmul per batch element (static unroll; nb is a
    # small compile-time constant).  HIGHEST precision keeps the f32 result
    # exact (rhs is exactly 0/1); MXU work stays well under the HBM roofline.
    for b in range(nb):
        sub = jnp.dot(
            x_ref[b],
            sel,
            preferred_element_type=jnp.float32,
            precision=jax.lax.Precision.HIGHEST,
        )
        o_ref[b, 0, :, :] = sub.astype(o_ref.dtype)


def _pick_batch_block(n, bytes_per_batch, budget_bytes):
    """Largest divisor of n whose (in+out) tile fits the budget, keeping >= 2
    grid steps when possible so both v7x TensorCores get work."""
    nb = 1
    for cand in range(1, n + 1):
        if n % cand:
            continue
        if cand * bytes_per_batch > budget_bytes:
            break
        if n // cand >= 2 or n == 1:
            nb = cand
    return nb


def downsample_a(x, *, tile_budget_bytes=2 * 1024 * 1024):
    """DownsampleA forward.  x: (N, C, H, W) float array, stride fixed to 2."""
    N, C, H, W = x.shape
    assert H % 2 == 0 and W % 2 == 0
    Ho, Wo = H // 2, W // 2
    dtype = x.dtype
    itemsize = jnp.dtype(dtype).itemsize

    # Free (metadata-only) view: each row packs one even/odd spatial row pair.
    x_rows = x.reshape(N, C * Ho, 2 * W)

    # 0/1 selection matrix: keeps element 2*j of the even half of each row;
    # rows W..2W-1 (the odd spatial row) are all zero.
    sel = (
        jnp.zeros((2 * W, Wo), dtype)
        .at[2 * jnp.arange(Wo), jnp.arange(Wo)]
        .set(1)
    )

    bytes_per_batch = (C * H * W + 2 * C * Ho * Wo) * itemsize
    nb = _pick_batch_block(N, bytes_per_batch, tile_budget_bytes)
    grid = (N // nb,)

    out_flat = pl.pallas_call(
        downsample_a_kernel,
        out_shape=jax.ShapeDtypeStruct((N, 2, C * Ho, Wo), dtype),
        grid=grid,
        in_specs=[
            pl.BlockSpec((nb, C * Ho, 2 * W), lambda i: (i, 0, 0)),
            # Constant selection matrix: same block every step -> fetched once.
            pl.BlockSpec((2 * W, Wo), lambda i: (0, 0)),
        ],
        out_specs=pl.BlockSpec((nb, 2, C * Ho, Wo), lambda i: (i, 0, 0, 0)),
        compiler_params=pltpu.CompilerParams(
            dimension_semantics=("parallel",),
        ),
    )(x_rows, sel)

    # (N, 2, C*Ho, Wo) row-major == (N, 2C, Ho, Wo): free reshape back.
    return out_flat.reshape(N, 2 * C, Ho, Wo)


def _reference(x):
    sub = x[:, :, ::2, ::2]
    return jnp.concatenate([sub, jnp.zeros_like(sub)], axis=1)


if __name__ == "__main__":
    key = jax.random.PRNGKey(0)
    k0, k1 = jax.random.split(key)

    # Small shape consistent with the module (DownsampleA has no parameters).
    x0 = jax.random.normal(k0, (2, 4, 16, 16), dtype=jnp.float32)
    out0 = jax.block_until_ready(downsample_a(x0))
    assert out0.shape == (2, 8, 8, 8), out0.shape
    assert jnp.allclose(out0, _reference(x0), rtol=1e-6, atol=1e-6), "mismatch"

    # Second small shape exercising nb > 1 (multiple batch elements per step).
    x1 = jax.random.normal(k1, (8, 16, 8, 8), dtype=jnp.float32)
    out1 = jax.block_until_ready(downsample_a(x1))
    assert out1.shape == (8, 32, 4, 4), out1.shape
    assert jnp.allclose(out1, _reference(x1), rtol=1e-6, atol=1e-6), "mismatch"

    print("KERNEL_OK")
</pallas_src>

<mosaic_0001>
module attributes {stable_mosaic.version = 11 : i64} {
  func.func @downsample_a_kernel(%arg0: i32, %arg1: memref<1x32x32xf32, #tpu.memory_space<vmem>>, %arg2: memref<32x8xf32, #tpu.memory_space<vmem>>, %arg3: memref<1x2x32x8xf32, #tpu.memory_space<vmem>>) attributes {dimension_semantics = [#tpu.dimension_semantics<parallel>], iteration_bounds = array<i64: 2>, scalar_prefetch = 0 : i64, scratch_operands = 0 : i64, tpu.core_type = #tpu.core_type<tc>, window_params = [{transform_indices = @transform_0, window_bounds = array<i64: 1, 32, 32>}, {pipeline_mode = #tpu.pipeline_mode<synchronous>, transform_indices = @transform_1, window_bounds = array<i64: 32, 8>}, {transform_indices = @transform_2, window_bounds = array<i64: 1, 2, 32, 8>}]} {
    %c0 = arith.constant 0 : index
    %c0_0 = arith.constant 0 : index
    %0 = vector.load %arg2[%c0, %c0_0] : memref<32x8xf32, #tpu.memory_space<vmem>>, vector<32x8xf32>
    %cst = arith.constant 0.000000e+00 : f32
    %1 = vector.broadcast %cst : f32 to vector<1x32x8xf32>
    %c0_1 = arith.constant 0 : index
    %c1 = arith.constant 1 : index
    %c0_2 = arith.constant 0 : index
    %c0_3 = arith.constant 0 : index
    %2 = vector.load %arg3[%c0_1, %c1, %c0_2, %c0_3] : memref<1x2x32x8xf32, #tpu.memory_space<vmem>>, vector<1x1x32x8xf32>
    %3 = vector.shape_cast %2 : vector<1x1x32x8xf32> to vector<1x32x8xf32>
    %4 = vector.shape_cast %1 : vector<1x32x8xf32> to vector<1x1x32x8xf32>
    tpu.vector_store %arg3[%c0_1, %c1, %c0_2, %c0_3], %4 {strides = array<i32>} : memref<1x2x32x8xf32, #tpu.memory_space<vmem>>, vector<1x1x32x8xf32>,
    %c0_4 = arith.constant 0 : index
    %c0_5 = arith.constant 0 : index
    %c0_6 = arith.constant 0 : index
    %5 = vector.load %arg1[%c0_4, %c0_5, %c0_6] : memref<1x32x32xf32, #tpu.memory_space<vmem>>, vector<1x32x32xf32>
    %6 = vector.shape_cast %5 : vector<1x32x32xf32> to vector<32x32xf32>
    %cst_7 = arith.constant dense<0.000000e+00> : vector<32x8xf32>
    %7 = tpu.matmul %6, %0, %cst_7 {dimension_numbers = #tpu.dot_dimension_numbers<[1], [0], [0], [1], [0, 0, 1, 1], [], []>, precision = #tpu.contract_precision<fp32>} : vector<32x32xf32>, vector<32x8xf32>, vector<32x8xf32> -> vector<32x8xf32>
    %c0_8 = arith.constant 0 : index
    %c0_9 = arith.constant 0 : index
    %c0_10 = arith.constant 0 : index
    %c0_11 = arith.constant 0 : index
    %8 = vector.load %arg3[%c0_8, %c0_9, %c0_10, %c0_11] : memref<1x2x32x8xf32, #tpu.memory_space<vmem>>, vector<1x1x32x8xf32>
    %9 = vector.shape_cast %8 : vector<1x1x32x8xf32> to vector<32x8xf32>
    %10 = vector.shape_cast %7 : vector<32x8xf32> to vector<1x1x32x8xf32>
    tpu.vector_store %arg3[%c0_8, %c0_9, %c0_10, %c0_11], %10 {strides = array<i32>} : memref<1x2x32x8xf32, #tpu.memory_space<vmem>>, vector<1x1x32x8xf32>,
    return
  }
  func.func @transform_0(%arg0: i32) -> (i32, i32, i32) {
    %c0_i32 = arith.constant 0 : i32
    %c0_i32_0 = arith.constant 0 : i32
    %c0_i32_1 = arith.constant 0 : i32
    return %arg0, %c0_i32, %c0_i32_0 : i32, i32, i32
  }
  func.func @transform_1(%arg0: i32) -> (i32, i32) {
    %c0_i32 = arith.constant 0 : i32
    %c0_i32_0 = arith.constant 0 : i32
    %c0_i32_1 = arith.constant 0 : i32
    return %c0_i32, %c0_i32_0 : i32, i32
  }
  func.func @transform_2(%arg0: i32) -> (i32, i32, i32, i32) {
    %c0_i32 = arith.constant 0 : i32
    %c0_i32_0 = arith.constant 0 : i32
    %c0_i32_1 = arith.constant 0 : i32
    %c0_i32_2 = arith.constant 0 : i32
    return %arg0, %c0_i32, %c0_i32_0, %c0_i32_1 : i32, i32, i32, i32
  }
}

</mosaic_0001>

<llo_original>
// kernel: tpu_custom_call.1
$region0: #{tpu_custom_call.1}
  #allocation0 [shape = 'u32[]', space=smem, size = 0x4, offset = 0x4, fixed_abs, tag = 'smem constant byte address 0x4 - core index']
  #allocation1 [shape = 'u32[144,128]{1,0:T(1,128)}', space=vmem, size = 0x12000, scoped, tag = 'internal scratch']
  %s0 = inlined_call_operand.hbm [shape: f32[2,32,32], index: 0, kind: input, shape index: {}]
  %s1 = inlined_call_operand.vmem [shape: f32[32,8], index: 1, kind: input, shape index: {}]
  %s2 = inlined_call_operand.vmem [shape: f32[2,2,32,8], index: 2, kind: output, shape index: {}]
  %s3 = sld [smem:[#allocation0]]
  $region45: #{tpu_custom_call.1} parent=0
    _
  %s5 = ssub.s32 1, %s3
  %s6 = scalar_select 0, %s5, %s3
  $region1: #{tpu_custom_call.1} parent=0
    #allocation2 [shape = 'u8[32768]{0}', space=vmem, size = 0x8000, scoped, tag = 'input window, operand 0']
    #allocation3 [shape = 's32[2]{0}', space=sflag, size = 0x8, scoped, tag = 'scoped memory for tpu_custom_call.1']
    %7 = vsyncpa [#allocation3], 0
    %s8 = scalar_lea.sflag [#allocation3], 1
    %9 = vsyncpa %s8, 0
    loop: start=0, step=1, limit=4
    $region2: #{tpu_custom_call.1} parent=1 // loop_pre_header
      _
    $region3: #{tpu_custom_call.1} parent=1 // loop_header
      %s11 = sphi 0, %s15
      %p12 = scmp.ge.s32.totalorder %s11, 4
      %s21 = sphi 0, %s23
      %s24 = sphi 0, %s21
      %s25 = sphi 0, %s24
      %s41 = sphi 0, %s25
      %s45 = sphi 0, %s45
      %s47 = sphi 0, %s45
      %s48 = sphi 0, %s47
      %s62 = sphi 0, %s48
      %s68 = sphi 0, %s70
      %s71 = sphi 0, %s68
      %s72 = sphi 0, %s71
      %s88 = sphi 0, %s72
    $region4: #{tpu_custom_call.1} parent=1 // loop_header_branch
      %14 = sbr.rel (%p12) target = $region8
    $region5: #{tpu_custom_call.1} parent=1 // loop_body
      %s16 = ssub.s32 %s11, 1
      %s17 = ssub.s32 %s11, 2
      %s18 = sadd.s32 %s11, 1
      %s19 = ssub.s32 %s11, %s18
      %p20 = scmp.eq.s32.totalorder %s19, 0
      %s22 = sadd.s32 %s21, 1
      %s23 = scalar_select %p20, %s21, %s22
      %p26 = pneg %p20
      %p27 = scmp.eq.s32.totalorder %s11, 1
      %p28 = por %p26, %p27
      %p29 = scmp.ne.s32.totalorder %s21, %s24
      %p30 = scmp.eq.s32.totalorder %s11, 0
      %p31 = por %p29, %p30
      %p32 = scmp.ne.s32.totalorder %s21, %s24
      %p33 = scmp.eq.s32.totalorder %s16, 1
      %p34 = por %p32, %p33
      %p35 = scmp.ne.s32.totalorder %s24, %s25
      %p36 = scmp.eq.s32.totalorder %s16, 0
      %p37 = por %p35, %p36
      %p38 = scmp.ne.s32.totalorder %s24, %s25
      %p39 = scmp.eq.s32.totalorder %s17, 1
      %p40 = por %p38, %p39
      %p42 = scmp.ne.s32.totalorder %s25, %s41
      %p43 = scmp.eq.s32.totalorder %s17, 0
      %p44 = por %p42, %p43
      %s46 = sadd.s32 %s45, 1
      %p49 = scmp.eq.s32.totalorder %s11, 1
      %p50 = scmp.ne.s32.totalorder %s45, %s47
      %p51 = scmp.eq.s32.totalorder %s11, 0
      %p52 = por %p50, %p51
      %p53 = scmp.ne.s32.totalorder %s45, %s47
      %p54 = scmp.eq.s32.totalorder %s16, 1
      %p55 = por %p53, %p54
      %p56 = scmp.ne.s32.totalorder %s47, %s48
      %p57 = scmp.eq.s32.totalorder %s16, 0
      %p58 = por %p56, %p57
      %p59 = scmp.ne.s32.totalorder %s47, %s48
      %p60 = scmp.eq.s32.totalorder %s17, 1
      %p61 = por %p59, %p60
      %p63 = scmp.ne.s32.totalorder %s48, %s62
      %p64 = scmp.eq.s32.totalorder %s17, 0
      %p65 = por %p63, %p64
      %s66 = ssub.s32 %s11, %s18
      %p67 = scmp.eq.s32.totalorder %s66, 0
      %s69 = sadd.s32 %s68, 1
      %s70 = scalar_select %p67, %s68, %s69
      %p73 = pneg %p67
      %p74 = scmp.eq.s32.totalorder %s11, 1
      %p75 = por %p73, %p74
      %p76 = scmp.ne.s32.totalorder %s68, %s71
      %p77 = scmp.eq.s32.totalorder %s11, 0
      %p78 = por %p76, %p77
      %p79 = scmp.ne.s32.totalorder %s68, %s71
      %p80 = scmp.eq.s32.totalorder %s16, 1
      %p81 = por %p79, %p80
      %p82 = scmp.ne.s32.totalorder %s71, %s72
      %p83 = scmp.eq.s32.totalorder %s16, 0
      %p84 = por %p82, %p83
      %p85 = scmp.ne.s32.totalorder %s71, %s72
      %p86 = scmp.eq.s32.totalorder %s17, 1
      %p87 = por %p85, %p86
      %p89 = scmp.ne.s32.totalorder %s72, %s88
      %p90 = scmp.eq.s32.totalorder %s17, 0
      %p91 = por %p89, %p90
      %p92 = scmp.le.s32.totalorder 1, %s11
      %p93 = scmp.lt.s32.totalorder %s11, 3
      %p94 = pnand %p92, %p93
      %p95 = pneg %p94
      // Predicated region
      $region9: #{tpu_custom_call.1} parent=5 // pred_check
        _
      $region10: #{tpu_custom_call.1} parent=5 // pred_check_branch
        %97 = sbr.rel (%p94) target = $region12
      $region11: #{tpu_custom_call.1} parent=5 // pred_region
        %s98 = ssub.s32 %s11, 1
        // Predicated region
        $region13: #{tpu_custom_call.1} parent=11 // pred_check
          %p99 = pneg %p58
        $region14: #{tpu_custom_call.1} parent=11 // pred_check_branch
          %101 = sbr.rel (%p99) target = $region16
        $region15: #{tpu_custom_call.1} parent=11 // pred_region
          _
        $region16: #{tpu_custom_call.1} parent=11 // pred_fallthru
          _
      $region12: #{tpu_custom_call.1} parent=5 // pred_fallthru
        _
      %p102 = scmp.lt.s32.totalorder %s11, 2
      // Predicated region
      $region17: #{tpu_custom_call.1} parent=5 // pred_check
        %p103 = pneg %p102
      $region18: #{tpu_custom_call.1} parent=5 // pred_check_branch
        %105 = sbr.rel (%p103) target = $region20
      $region19: #{tpu_custom_call.1} parent=5 // pred_region
        // Predicated region
        $region21: #{tpu_custom_call.1} parent=19 // pred_check
          %p106 = pneg %p31
        $region22: #{tpu_custom_call.1} parent=19 // pred_check_branch
          %108 = sbr.rel (%p106) target = $region24
        $region23: #{tpu_custom_call.1} parent=19 // pred_region
          %s109 = sand.u32 %s21, 1
          %s110 = scalar_lea.sflag [#allocation3], %s109
          %s111 = sand.u32 %s21, 1
          %s112 = smul.addr %s111, 32
          %s113 = scalar_lea.vmem [#allocation2], %s112
          %s115 = ssub.s32 512, 512
          %116 = vsyncadd %s110, %s115
          %s117 = smul.addr %s11, 4
          %s118 = smul.addr %s117, 128
          %s119 = scalar_lea.hbm %s0, %s118
          %s120 = sshll.u32 %s113, 4
          %s121 = int_to_ptr.vmem [resolvable:$true] %s120
          %126 = dma.hbm_to_vmem [thread:$0]  %s119, 512, %s121, %s110, 128, 128, 8
        $region24: #{tpu_custom_call.1} parent=19 // pred_fallthru
          _
      $region20: #{tpu_custom_call.1} parent=5 // pred_fallthru
        _
      %p127 = scmp.le.s32.totalorder 1, %s11
      %p128 = scmp.lt.s32.totalorder %s11, 3
      %p129 = pnand %p127, %p128
      %p130 = pneg %p129
      // Predicated region
      $region25: #{tpu_custom_call.1} parent=5 // pred_check
        _
      $region26: #{tpu_custom_call.1} parent=5 // pred_check_branch
        %132 = sbr.rel (%p129) target = $region28
      $region27: #{tpu_custom_call.1} parent=5 // pred_region
        %s133 = ssub.s32 %s11, 1
        %s134 = sand.u32 %s24, 1
        %s135 = scalar_lea.sflag [#allocation3], %s134
        %s136 = sand.u32 %s24, 1
        %s137 = smul.addr %s136, 32
        %s138 = scalar_lea.vmem [#allocation2], %s137
        // Predicated region
        $region29: #{tpu_custom_call.1} parent=27 // pred_check
          %p139 = pneg %p37
        $region30: #{tpu_custom_call.1} parent=27 // pred_check_branch
          %141 = sbr.rel (%p139) target = $region32
        $region31: #{tpu_custom_call.1} parent=27 // pred_region
          %142 = dma.done %s135, 512
        $region32: #{tpu_custom_call.1} parent=27 // pred_fallthru
          _
        %s143 = sand.u32 %s24, 1
        %s144 = scalar_lea.sflag [#allocation3], %s143
        %s145 = sand.u32 %s24, 1
        %s146 = smul.addr %s145, 32
        %s147 = scalar_lea.vmem [#allocation2], %s146
        %p148 = pneg %p37
        %p149 = pneg %p34
        %p150 = pneg %p58
        %p151 = pneg %p55
        %p152 = pneg %p84
        %p153 = pneg %p81
        %p154 = scmp.lt.s32.totalorder %s16, 1
        %s155 = scalar_select %p154, %s16, 1
        %s156 = smul.addr %s155, 8
        %s157 = smul.addr %s156, 8
        %s158 = scalar_lea.vmem %s2, %s157
        %p159 = scmp.lt.s32.totalorder %s16, 1
        %s160 = scalar_select %p159, %s16, 1
        %s161 = smul.addr %s160, 8
        %s162 = smul.addr %s161, 8
        %s163 = scalar_lea.vmem %s2, %s162
        %v164 = vld [vmem:[%s1] sm:$0xff]
        %v165 = vld [vmem:[%s1 + $0x8] sm:$0xff]
        %v166 = vld [vmem:[%s1 + $0x10] sm:$0xff]
        %v167 = vld [vmem:[%s1 + $0x18] sm:$0xff]
        %s168 = scalar_lea.vmem %s163, 32
        %vm169 = vcmask 64512
        %170 = vst.msk [vmem:[%s168] sm:$0xff] %vm169, 0.0
        %171 = vst.msk [vmem:[%s168 + $0x8] sm:$0xff] %vm169, 0.0
        %172 = vst.msk [vmem:[%s168 + $0x10] sm:$0xff] %vm169, 0.0
        %173 = vst.msk [vmem:[%s168 + $0x18] sm:$0xff] %vm169, 0.0
        %v174 = vld [vmem:[%s138] sm:$0xff]
        %v175 = vld [vmem:[%s138 + $0x8] sm:$0xff]
        %v176 = vld [vmem:[%s138 + $0x10] sm:$0xff]
        %v177 = vld [vmem:[%s138 + $0x18] sm:$0xff]
        %vm178 = vcmask 261120
        %v180 = vsel %vm178, %v174, 0
        %v183 = vsel %vm178, %v175, 0
        %v186 = vsel %vm178, %v176, 0
        %v189 = vsel %vm178, %v177, 0
        %191 = vmatprep.subr.mxu0 0.0
        %v192 = vand.u32 %v164, 4294901760
        %193 = vmatpush1.msra.mxu0 %v192
        %194 = vmatprep.subr.mxu0 0.0
        %v195 = vand.u32 %v165, 4294901760
        %196 = vmatpush1.msra.mxu0 %v195
        %197 = vmatprep.subr.mxu0 0.0
        %v198 = vand.u32 %v166, 4294901760
        %199 = vmatpush1.msra.mxu0 %v198
        %200 = vmatprep.subr.mxu0 0.0
        %v201 = vand.u32 %v167, 4294901760
        %202 = vmatpush1.msra.mxu0 %v201
        %203 = vmatprep.subr.mxu0 0.0
        %204 = vmatpush1.msra.mxu0 0.0
        %205 = vmatprep.subr.mxu0 0.0
        %206 = vmatpush1.msra.mxu0 0.0
        %207 = vmatprep.subr.mxu0 0.0
        %208 = vmatpush1.msra.mxu0 0.0
        %209 = vmatprep.subr.mxu0 0.0
        %210 = vmatpush1.msra.mxu0 0.0
        %211 = vmatprep.subr.mxu0 0.0
        %212 = vmatpush1.msra.mxu0 0.0
        %213 = vmatprep.subr.mxu0 0.0
        %214 = vmatpush1.msra.mxu0 0.0
        %215 = vmatprep.subr.mxu0 0.0
        %216 = vmatpush1.msra.mxu0 0.0
        %217 = vmatprep.subr.mxu0 0.0
        %218 = vmatpush1.msra.mxu0 0.0
        %219 = vmatprep.subr.mxu0 0.0
        %220 = vmatpush1.msra.mxu0 0.0
        %221 = vmatprep.subr.mxu0 0.0
        %222 = vmatpush1.msra.mxu0 0.0
        %223 = vmatprep.subr.mxu0 0.0
        %224 = vmatpush1.msra.mxu0 0.0
        %225 = vmatprep.subr.mxu0 0.0
        %226 = vmatpush1.msra.mxu0 0.0
        %227 = vmatprep.subr.mxu0 0.0
        %228 = vmatpush1.msra.mxu0 0.0
        %229 = vmatprep.subr.mxu0 0.0
        %230 = vmatpush1.msra.mxu0 0.0
        %231 = vmatprep.subr.mxu0 0.0
        %232 = vmatpush1.msra.mxu0 0.0
        %233 = vmatprep.subr.mxu0 0.0
        %234 = vmatpush1.msra.mxu0 0.0
        %235 = vmatprep.subr.mxu0 0.0
        %236 = vmatpush1.msra.mxu0 0.0
        %237 = vmatprep.subr.mxu0 0.0
        %238 = vmatpush1.msra.mxu0 0.0
        %239 = vmatprep.subr.mxu0 0.0
        %240 = vmatpush1.msra.mxu0 0.0
        %241 = vmatprep.subr.mxu0 0.0
        %242 = vmatpush1.msra.mxu0 0.0
        %243 = vmatprep.subr.mxu0 0.0
        %244 = vmatpush1.msra.mxu0 0.0
        %245 = vmatprep.subr.mxu0 0.0
        %246 = vmatpush1.msra.mxu0 0.0
        %247 = vmatprep.subr.mxu0 0.0
        %248 = vmatpush1.msra.mxu0 0.0
        %249 = vmatprep.subr.mxu0 0.0
        %250 = vmatpush1.msra.mxu0 0.0
        %251 = vmatprep.subr.mxu0 0.0
        %252 = vmatpush1.msra.mxu0 0.0
        %253 = vmatprep.subr.mxu0 0.0
        %254 = vmatpush1.msra.mxu0 0.0
        %255 = vmatprep.subr.mxu0 0.0
        %256 = vmatpush1.msra.mxu0 0.0
        %257 = vmatprep.subr.mxu0 0.0
        %258 = vmatpush1.msra.mxu0 0.0
        %259 = vmatprep.mubr.f32.mxu0 0.0
        %v260 = vand.u32 %v180, 4294901760
        %v261 = vsub.f32 %v180, %v260
        %v262 = vand.u32 %v261, 4294901760
        %v263 = vsub.f32 %v261, %v262
        %v264 = vand.u32 %v263, 4294901760
        %265 = vmatmul.mubr.f32.gmra.mrb[0].mxu0 %v264
        %v266 = vpop.f32.mrb[0].mxu0
        %v267 = vadd.f32 0.0, %v266
        %v268 = vpop.f32.mrb[0].mxu0
        %269 = vmatprep.mubr.f32.mxu0 0.0
        %v270 = vand.u32 %v183, 4294901760
        %v271 = vsub.f32 %v183, %v270
        %v272 = vand.u32 %v271, 4294901760
        %v273 = vsub.f32 %v271, %v272
        %v274 = vand.u32 %v273, 4294901760
        %275 = vmatmul.mubr.f32.gmra.mrb[0].mxu0 %v274
        %v276 = vpop.f32.mrb[0].mxu0
        %v277 = vadd.f32 0.0, %v276
        %v278 = vpop.f32.mrb[0].mxu0
        %279 = vmatprep.mubr.f32.mxu0 0.0
        %v280 = vand.u32 %v186, 4294901760
        %v281 = vsub.f32 %v186, %v280
        %v282 = vand.u32 %v281, 4294901760
        %v283 = vsub.f32 %v281, %v282
        %v284 = vand.u32 %v283, 4294901760
        %285 = vmatmul.mubr.f32.gmra.mrb[0].mxu0 %v284
        %v286 = vpop.f32.mrb[0].mxu0
        %v287 = vadd.f32 0.0, %v286
        %v288 = vpop.f32.mrb[0].mxu0
        %289 = vmatprep.mubr.f32.mxu0 0.0
        %v290 = vand.u32 %v189, 4294901760
        %v291 = vsub.f32 %v189, %v290
        %v292 = vand.u32 %v291, 4294901760
        %v293 = vsub.f32 %v291, %v292
        %v294 = vand.u32 %v293, 4294901760
        %295 = vmatmul.mubr.f32.gmra.mrb[0].mxu0 %v294
        %v296 = vpop.f32.mrb[0].mxu0
        %v297 = vadd.f32 0.0, %v296
        %v298 = vpop.f32.mrb[0].mxu0
        %299 = vdwg.mxu0
        %300 = vmatprep.subr.mxu0 0.0
        %v301 = vand.u32 %v164, 4294901760
        %v302 = vsub.f32 %v164, %v301
        %v303 = vand.u32 %v302, 4294901760
        %v304 = vsub.f32 %v302, %v303
        %v305 = vand.u32 %v304, 4294901760
        %306 = vmatpush1.msra.mxu0 %v305
        %307 = vmatprep.subr.mxu0 0.0
        %v308 = vand.u32 %v165, 4294901760
        %v309 = vsub.f32 %v165, %v308
        %v310 = vand.u32 %v309, 4294901760
        %v311 = vsub.f32 %v309, %v310
        %v312 = vand.u32 %v311, 4294901760
        %313 = vmatpush1.msra.mxu0 %v312
        %314 = vmatprep.subr.mxu0 0.0
        %v315 = vand.u32 %v166, 4294901760
        %v316 = vsub.f32 %v166, %v315
        %v317 = vand.u32 %v316, 4294901760
        %v318 = vsub.f32 %v316, %v317
        %v319 = vand.u32 %v318, 4294901760
        %320 = vmatpush1.msra.mxu0 %v319
        %321 = vmatprep.subr.mxu0 0.0
        %v322 = vand.u32 %v167, 4294901760
        %v323 = vsub.f32 %v167, %v322
        %v324 = vand.u32 %v323, 4294901760
        %v325 = vsub.f32 %v323, %v324
        %v326 = vand.u32 %v325, 4294901760
        %327 = vmatpush1.msra.mxu0 %v326
        %328 = vmatprep.subr.mxu0 0.0
        %329 = vmatpush1.msra.mxu0 0.0
        %330 = vmatprep.subr.mxu0 0.0
        %331 = vmatpush1.msra.mxu0 0.0
        %332 = vmatprep.subr.mxu0 0.0
        %333 = vmatpush1.msra.mxu0 0.0
        %334 = vmatprep.subr.mxu0 0.0
        %335 = vmatpush1.msra.mxu0 0.0
        %336 = vmatprep.subr.mxu0 0.0
        %337 = vmatpush1.msra.mxu0 0.0
        %338 = vmatprep.subr.mxu0 0.0
        %339 = vmatpush1.msra.mxu0 0.0
        %340 = vmatprep.subr.mxu0 0.0
        %341 = vmatpush1.msra.mxu0 0.0
        %342 = vmatprep.subr.mxu0 0.0
        %343 = vmatpush1.msra.mxu0 0.0
        %344 = vmatprep.subr.mxu0 0.0
        %345 = vmatpush1.msra.mxu0 0.0
        %346 = vmatprep.subr.mxu0 0.0
        %347 = vmatpush1.msra.mxu0 0.0
        %348 = vmatprep.subr.mxu0 0.0
        %349 = vmatpush1.msra.mxu0 0.0
        %350 = vmatprep.subr.mxu0 0.0
        %351 = vmatpush1.msra.mxu0 0.0
        %352 = vmatprep.subr.mxu0 0.0
        %353 = vmatpush1.msra.mxu0 0.0
        %354 = vmatprep.subr.mxu0 0.0
        %355 = vmatpush1.msra.mxu0 0.0
        %356 = vmatprep.subr.mxu0 0.0
        %357 = vmatpush1.msra.mxu0 0.0
        %358 = vmatprep.subr.mxu0 0.0
        %359 = vmatpush1.msra.mxu0 0.0
        %360 = vmatprep.subr.mxu0 0.0
        %361 = vmatpush1.msra.mxu0 0.0
        %362 = vmatprep.subr.mxu0 0.0
        %363 = vmatpush1.msra.mxu0 0.0
        %364 = vmatprep.subr.mxu0 0.0
        %365 = vmatpush1.msra.mxu0 0.0
        %366 = vmatprep.subr.mxu0 0.0
        %367 = vmatpush1.msra.mxu0 0.0
        %368 = vmatprep.subr.mxu0 0.0
        %369 = vmatpush1.msra.mxu0 0.0
        %370 = vmatprep.subr.mxu0 0.0
        %371 = vmatpush1.msra.mxu0 0.0
        %372 = vmatprep.subr.mxu0 0.0
        %373 = vmatpush1.msra.mxu0 0.0
        %374 = vmatprep.subr.mxu0 0.0
        %375 = vmatpush1.msra.mxu0 0.0
        %376 = vmatprep.subr.mxu0 0.0
        %377 = vmatpush1.msra.mxu0 0.0
        %378 = vmatprep.subr.mxu0 0.0
        %379 = vmatpush1.msra.mxu0 0.0
        %380 = vmatprep.subr.mxu0 0.0
        %381 = vmatpush1.msra.mxu0 0.0
        %382 = vmatprep.subr.mxu0 0.0
        %383 = vmatpush1.msra.mxu0 0.0
        %384 = vmatprep.mubr.f32.mxu0 0.0
        %v385 = vand.u32 %v180, 4294901760
        %386 = vmatmul.mubr.f32.gmra.mrb[0].mxu0 %v385
        %v387 = vpop.f32.mrb[0].mxu0
        %v388 = vadd.f32 %v267, %v387
        %v389 = vpop.f32.mrb[0].mxu0
        %390 = vmatprep.mubr.f32.mxu0 0.0
        %v391 = vand.u32 %v183, 4294901760
        %392 = vmatmul.mubr.f32.gmra.mrb[0].mxu0 %v391
        %v393 = vpop.f32.mrb[0].mxu0
        %v394 = vadd.f32 %v277, %v393
        %v395 = vpop.f32.mrb[0].mxu0
        %396 = vmatprep.mubr.f32.mxu0 0.0
        %v397 = vand.u32 %v186, 4294901760
        %398 = vmatmul.mubr.f32.gmra.mrb[0].mxu0 %v397
        %v399 = vpop.f32.mrb[0].mxu0
        %v400 = vadd.f32 %v287, %v399
        %v401 = vpop.f32.mrb[0].mxu0
        %402 = vmatprep.mubr.f32.mxu0 0.0
        %v403 = vand.u32 %v189, 4294901760
        %404 = vmatmul.mubr.f32.gmra.mrb[0].mxu0 %v403
        %v405 = vpop.f32.mrb[0].mxu0
        %v406 = vadd.f32 %v297, %v405
        %v407 = vpop.f32.mrb[0].mxu0
        %408 = vdwg.mxu0
        %409 = vmatprep.subr.mxu0 0.0
        %v410 = vand.u32 %v164, 4294901760
        %v411 = vsub.f32 %v164, %v410
        %412 = vmatpush1.msra.mxu0 %v411
        %413 = vmatprep.subr.mxu0 0.0
        %v414 = vand.u32 %v165, 4294901760
        %v415 = vsub.f32 %v165, %v414
        %416 = vmatpush1.msra.mxu0 %v415
        %417 = vmatprep.subr.mxu0 0.0
        %v418 = vand.u32 %v166, 4294901760
        %v419 = vsub.f32 %v166, %v418
        %420 = vmatpush1.msra.mxu0 %v419
        %421 = vmatprep.subr.mxu0 0.0
        %v422 = vand.u32 %v167, 4294901760
        %v423 = vsub.f32 %v167, %v422
        %424 = vmatpush1.msra.mxu0 %v423
        %425 = vmatprep.subr.mxu0 0.0
        %426 = vmatpush1.msra.mxu0 0.0
        %427 = vmatprep.subr.mxu0 0.0
        %428 = vmatpush1.msra.mxu0 0.0
        %429 = vmatprep.subr.mxu0 0.0
        %430 = vmatpush1.msra.mxu0 0.0
        %431 = vmatprep.subr.mxu0 0.0
        %432 = vmatpush1.msra.mxu0 0.0
        %433 = vmatprep.subr.mxu0 0.0
        %434 = vmatpush1.msra.mxu0 0.0
        %435 = vmatprep.subr.mxu0 0.0
        %436 = vmatpush1.msra.mxu0 0.0
        %437 = vmatprep.subr.mxu0 0.0
        %438 = vmatpush1.msra.mxu0 0.0
        %439 = vmatprep.subr.mxu0 0.0
        %440 = vmatpush1.msra.mxu0 0.0
        %441 = vmatprep.subr.mxu0 0.0
        %442 = vmatpush1.msra.mxu0 0.0
        %443 = vmatprep.subr.mxu0 0.0
        %444 = vmatpush1.msra.mxu0 0.0
        %445 = vmatprep.subr.mxu0 0.0
        %446 = vmatpush1.msra.mxu0 0.0
        %447 = vmatprep.subr.mxu0 0.0
        %448 = vmatpush1.msra.mxu0 0.0
        %449 = vmatprep.subr.mxu0 0.0
        %450 = vmatpush1.msra.mxu0 0.0
        %451 = vmatprep.subr.mxu0 0.0
        %452 = vmatpush1.msra.mxu0 0.0
        %453 = vmatprep.subr.mxu0 0.0
        %454 = vmatpush1.msra.mxu0 0.0
        %455 = vmatprep.subr.mxu0 0.0
        %456 = vmatpush1.msra.mxu0 0.0
        %457 = vmatprep.subr.mxu0 0.0
        %458 = vmatpush1.msra.mxu0 0.0
        %459 = vmatprep.subr.mxu0 0.0
        %460 = vmatpush1.msra.mxu0 0.0
        %461 = vmatprep.subr.mxu0 0.0
        %462 = vmatpush1.msra.mxu0 0.0
        %463 = vmatprep.subr.mxu0 0.0
        %464 = vmatpush1.msra.mxu0 0.0
        %465 = vmatprep.subr.mxu0 0.0
        %466 = vmatpush1.msra.mxu0 0.0
        %467 = vmatprep.subr.mxu0 0.0
        %468 = vmatpush1.msra.mxu0 0.0
        %469 = vmatprep.subr.mxu0 0.0
        %470 = vmatpush1.msra.mxu0 0.0
        %471 = vmatprep.subr.mxu0 0.0
        %472 = vmatpush1.msra.mxu0 0.0
        %473 = vmatprep.subr.mxu0 0.0
        %474 = vmatpush1.msra.mxu0 0.0
        %475 = vmatprep.subr.mxu0 0.0
        %476 = vmatpush1.msra.mxu0 0.0
        %477 = vmatprep.subr.mxu0 0.0
        %478 = vmatpush1.msra.mxu0 0.0
        %479 = vmatprep.subr.mxu0 0.0
        %480 = vmatpush1.msra.mxu0 0.0
        %481 = vmatprep.mubr.f32.mxu0 0.0
        %v482 = vand.u32 %v180, 4294901760
        %v483 = vsub.f32 %v180, %v482
        %484 = vmatmul.mubr.f32.gmra.mrb[0].mxu0 %v483
        %v485 = vpop.f32.mrb[0].mxu0
        %v486 = vadd.f32 %v388, %v485
        %v487 = vpop.f32.mrb[0].mxu0
        %488 = vmatprep.mubr.f32.mxu0 0.0
        %v489 = vand.u32 %v183, 4294901760
        %v490 = vsub.f32 %v183, %v489
        %491 = vmatmul.mubr.f32.gmra.mrb[0].mxu0 %v490
        %v492 = vpop.f32.mrb[0].mxu0
        %v493 = vadd.f32 %v394, %v492
        %v494 = vpop.f32.mrb[0].mxu0
        %495 = vmatprep.mubr.f32.mxu0 0.0
        %v496 = vand.u32 %v186, 4294901760
        %v497 = vsub.f32 %v186, %v496
        %498 = vmatmul.mubr.f32.gmra.mrb[0].mxu0 %v497
        %v499 = vpop.f32.mrb[0].mxu0
        %v500 = vadd.f32 %v400, %v499
        %v501 = vpop.f32.mrb[0].mxu0
        %502 = vmatprep.mubr.f32.mxu0 0.0
        %v503 = vand.u32 %v189, 4294901760
        %v504 = vsub.f32 %v189, %v503
        %505 = vmatmul.mubr.f32.gmra.mrb[0].mxu0 %v504
        %v506 = vpop.f32.mrb[0].mxu0
        %v507 = vadd.f32 %v406, %v506
        %v508 = vpop.f32.mrb[0].mxu0
        %509 = vdwg.mxu0
        %510 = vmatprep.subr.mxu0 0.0
        %v511 = vand.u32 %v164, 4294901760
        %512 = vmatpush1.msra.mxu0 %v511
        %513 = vmatprep.subr.mxu0 0.0
        %v514 = vand.u32 %v165, 4294901760
        %515 = vmatpush1.msra.mxu0 %v514
        %516 = vmatprep.subr.mxu0 0.0
        %v517 = vand.u32 %v166, 4294901760
        %518 = vmatpush1.msra.mxu0 %v517
        %519 = vmatprep.subr.mxu0 0.0
        %v520 = vand.u32 %v167, 4294901760
        %521 = vmatpush1.msra.mxu0 %v520
        %522 = vmatprep.subr.mxu0 0.0
        %523 = vmatpush1.msra.mxu0 0.0
        %524 = vmatprep.subr.mxu0 0.0
        %525 = vmatpush1.msra.mxu0 0.0
        %526 = vmatprep.subr.mxu0 0.0
        %527 = vmatpush1.msra.mxu0 0.0
        %528 = vmatprep.subr.mxu0 0.0
        %529 = vmatpush1.msra.mxu0 0.0
        %530 = vmatprep.subr.mxu0 0.0
        %531 = vmatpush1.msra.mxu0 0.0
        %532 = vmatprep.subr.mxu0 0.0
        %533 = vmatpush1.msra.mxu0 0.0
        %534 = vmatprep.subr.mxu0 0.0
        %535 = vmatpush1.msra.mxu0 0.0
        %536 = vmatprep.subr.mxu0 0.0
        %537 = vmatpush1.msra.mxu0 0.0
        %538 = vmatprep.subr.mxu0 0.0
        %539 = vmatpush1.msra.mxu0 0.0
        %540 = vmatprep.subr.mxu0 0.0
        %541 = vmatpush1.msra.mxu0 0.0
        %542 = vmatprep.subr.mxu0 0.0
        %543 = vmatpush1.msra.mxu0 0.0
        %544 = vmatprep.subr.mxu0 0.0
        %545 = vmatpush1.msra.mxu0 0.0
        %546 = vmatprep.subr.mxu0 0.0
        %547 = vmatpush1.msra.mxu0 0.0
        %548 = vmatprep.subr.mxu0 0.0
        %549 = vmatpush1.msra.mxu0 0.0
        %550 = vmatprep.subr.mxu0 0.0
        %551 = vmatpush1.msra.mxu0 0.0
        %552 = vmatprep.subr.mxu0 0.0
        %553 = vmatpush1.msra.mxu0 0.0
        %554 = vmatprep.subr.mxu0 0.0
        %555 = vmatpush1.msra.mxu0 0.0
        %556 = vmatprep.subr.mxu0 0.0
        %557 = vmatpush1.msra.mxu0 0.0
        %558 = vmatprep.subr.mxu0 0.0
        %559 = vmatpush1.msra.mxu0 0.0
        %560 = vmatprep.subr.mxu0 0.0
        %561 = vmatpush1.msra.mxu0 0.0
        %562 = vmatprep.subr.mxu0 0.0
        %563 = vmatpush1.msra.mxu0 0.0
        %564 = vmatprep.subr.mxu0 0.0
        %565 = vmatpush1.msra.mxu0 0.0
        %566 = vmatprep.subr.mxu0 0.0
        %567 = vmatpush1.msra.mxu0 0.0
        %568 = vmatprep.subr.mxu0 0.0
        %569 = vmatpush1.msra.mxu0 0.0
        %570 = vmatprep.subr.mxu0 0.0
        %571 = vmatpush1.msra.mxu0 0.0
        %572 = vmatprep.subr.mxu0 0.0
        %573 = vmatpush1.msra.mxu0 0.0
        %574 = vmatprep.subr.mxu0 0.0
        %575 = vmatpush1.msra.mxu0 0.0
        %576 = vmatprep.subr.mxu0 0.0
        %577 = vmatpush1.msra.mxu0 0.0
        %578 = vmatprep.mubr.f32.mxu0 0.0
        %v579 = vand.u32 %v180, 4294901760
        %v580 = vsub.f32 %v180, %v579
        %v581 = vand.u32 %v580, 4294901760
        %582 = vmatmul.mubr.f32.gmra.mrb[0].mxu0 %v581
        %v583 = vpop.f32.mrb[0].mxu0
        %v584 = vadd.f32 %v486, %v583
        %v585 = vpop.f32.mrb[0].mxu0
        %586 = vmatprep.mubr.f32.mxu0 0.0
        %v587 = vand.u32 %v183, 4294901760
        %v588 = vsub.f32 %v183, %v587
        %v589 = vand.u32 %v588, 4294901760
        %590 = vmatmul.mubr.f32.gmra.mrb[0].mxu0 %v589
        %v591 = vpop.f32.mrb[0].mxu0
        %v592 = vadd.f32 %v493, %v591
        %v593 = vpop.f32.mrb[0].mxu0
        %594 = vmatprep.mubr.f32.mxu0 0.0
        %v595 = vand.u32 %v186, 4294901760
        %v596 = vsub.f32 %v186, %v595
        %v597 = vand.u32 %v596, 4294901760
        %598 = vmatmul.mubr.f32.gmra.mrb[0].mxu0 %v597
        %v599 = vpop.f32.mrb[0].mxu0
        %v600 = vadd.f32 %v500, %v599
        %v601 = vpop.f32.mrb[0].mxu0
        %602 = vmatprep.mubr.f32.mxu0 0.0
        %v603 = vand.u32 %v189, 4294901760
        %v604 = vsub.f32 %v189, %v603
        %v605 = vand.u32 %v604, 4294901760
        %606 = vmatmul.mubr.f32.gmra.mrb[0].mxu0 %v605
        %v607 = vpop.f32.mrb[0].mxu0
        %v608 = vadd.f32 %v507, %v607
        %v609 = vpop.f32.mrb[0].mxu0
        %610 = vdwg.mxu0
        %611 = vmatprep.subr.mxu0 0.0
        %v612 = vand.u32 %v164, 4294901760
        %v613 = vsub.f32 %v164, %v612
        %v614 = vand.u32 %v613, 4294901760
        %615 = vmatpush1.msra.mxu0 %v614
        %616 = vmatprep.subr.mxu0 0.0
        %v617 = vand.u32 %v165, 4294901760
        %v618 = vsub.f32 %v165, %v617
        %v619 = vand.u32 %v618, 4294901760
        %620 = vmatpush1.msra.mxu0 %v619
        %621 = vmatprep.subr.mxu0 0.0
        %v622 = vand.u32 %v166, 4294901760
        %v623 = vsub.f32 %v166, %v622
        %v624 = vand.u32 %v623, 4294901760
        %625 = vmatpush1.msra.mxu0 %v624
        %626 = vmatprep.subr.mxu0 0.0
        %v627 = vand.u32 %v167, 4294901760
        %v628 = vsub.f32 %v167, %v627
        %v629 = vand.u32 %v628, 4294901760
        %630 = vmatpush1.msra.mxu0 %v629
        %631 = vmatprep.subr.mxu0 0.0
        %632 = vmatpush1.msra.mxu0 0.0
        %633 = vmatprep.subr.mxu0 0.0
        %634 = vmatpush1.msra.mxu0 0.0
        %635 = vmatprep.subr.mxu0 0.0
        %636 = vmatpush1.msra.mxu0 0.0
        %637 = vmatprep.subr.mxu0 0.0
        %638 = vmatpush1.msra.mxu0 0.0
        %639 = vmatprep.subr.mxu0 0.0
        %640 = vmatpush1.msra.mxu0 0.0
        %641 = vmatprep.subr.mxu0 0.0
        %642 = vmatpush1.msra.mxu0 0.0
        %643 = vmatprep.subr.mxu0 0.0
        %644 = vmatpush1.msra.mxu0 0.0
        %645 = vmatprep.subr.mxu0 0.0
        %646 = vmatpush1.msra.mxu0 0.0
        %647 = vmatprep.subr.mxu0 0.0
        %648 = vmatpush1.msra.mxu0 0.0
        %649 = vmatprep.subr.mxu0 0.0
        %650 = vmatpush1.msra.mxu0 0.0
        %651 = vmatprep.subr.mxu0 0.0
        %652 = vmatpush1.msra.mxu0 0.0
        %653 = vmatprep.subr.mxu0 0.0
        %654 = vmatpush1.msra.mxu0 0.0
        %655 = vmatprep.subr.mxu0 0.0
        %656 = vmatpush1.msra.mxu0 0.0
        %657 = vmatprep.subr.mxu0 0.0
        %658 = vmatpush1.msra.mxu0 0.0
        %659 = vmatprep.subr.mxu0 0.0
        %660 = vmatpush1.msra.mxu0 0.0
        %661 = vmatprep.subr.mxu0 0.0
        %662 = vmatpush1.msra.mxu0 0.0
        %663 = vmatprep.subr.mxu0 0.0
        %664 = vmatpush1.msra.mxu0 0.0
        %665 = vmatprep.subr.mxu0 0.0
        %666 = vmatpush1.msra.mxu0 0.0
        %667 = vmatprep.subr.mxu0 0.0
        %668 = vmatpush1.msra.mxu0 0.0
        %669 = vmatprep.subr.mxu0 0.0
        %670 = vmatpush1.msra.mxu0 0.0
        %671 = vmatprep.subr.mxu0 0.0
        %672 = vmatpush1.msra.mxu0 0.0
        %673 = vmatprep.subr.mxu0 0.0
        %674 = vmatpush1.msra.mxu0 0.0
        %675 = vmatprep.subr.mxu0 0.0
        %676 = vmatpush1.msra.mxu0 0.0
        %677 = vmatprep.subr.mxu0 0.0
        %678 = vmatpush1.msra.mxu0 0.0
        %679 = vmatprep.subr.mxu0 0.0
        %680 = vmatpush1.msra.mxu0 0.0
        %681 = vmatprep.subr.mxu0 0.0
        %682 = vmatpush1.msra.mxu0 0.0
        %683 = vmatprep.subr.mxu0 0.0
        %684 = vmatpush1.msra.mxu0 0.0
        %685 = vmatprep.subr.mxu0 0.0
        %686 = vmatpush1.msra.mxu0 0.0
        %687 = vmatprep.mubr.f32.mxu0 0.0
        %v688 = vand.u32 %v180, 4294901760
        %689 = vmatmul.mubr.f32.gmra.mrb[0].mxu0 %v688
        %v690 = vpop.f32.mrb[0].mxu0
        %v691 = vadd.f32 %v584, %v690
        %v692 = vpop.f32.mrb[0].mxu0
        %693 = vmatprep.mubr.f32.mxu0 0.0
        %v694 = vand.u32 %v183, 4294901760
        %695 = vmatmul.mubr.f32.gmra.mrb[0].mxu0 %v694
        %v696 = vpop.f32.mrb[0].mxu0
        %v697 = vadd.f32 %v592, %v696
        %v698 = vpop.f32.mrb[0].mxu0
        %699 = vmatprep.mubr.f32.mxu0 0.0
        %v700 = vand.u32 %v186, 4294901760
        %701 = vmatmul.mubr.f32.gmra.mrb[0].mxu0 %v700
        %v702 = vpop.f32.mrb[0].mxu0
        %v703 = vadd.f32 %v600, %v702
        %v704 = vpop.f32.mrb[0].mxu0
        %705 = vmatprep.mubr.f32.mxu0 0.0
        %v706 = vand.u32 %v189, 4294901760
        %707 = vmatmul.mubr.f32.gmra.mrb[0].mxu0 %v706
        %v708 = vpop.f32.mrb[0].mxu0
        %v709 = vadd.f32 %v608, %v708
        %v710 = vpop.f32.mrb[0].mxu0
        %711 = vdwg.mxu0
        %712 = vmatprep.subr.mxu0 0.0
        %v713 = vand.u32 %v164, 4294901760
        %714 = vmatpush1.msra.mxu0 %v713
        %715 = vmatprep.subr.mxu0 0.0
        %v716 = vand.u32 %v165, 4294901760
        %717 = vmatpush1.msra.mxu0 %v716
        %718 = vmatprep.subr.mxu0 0.0
        %v719 = vand.u32 %v166, 4294901760
        %720 = vmatpush1.msra.mxu0 %v719
        %721 = vmatprep.subr.mxu0 0.0
        %v722 = vand.u32 %v167, 4294901760
        %723 = vmatpush1.msra.mxu0 %v722
        %724 = vmatprep.subr.mxu0 0.0
        %725 = vmatpush1.msra.mxu0 0.0
        %726 = vmatprep.subr.mxu0 0.0
        %727 = vmatpush1.msra.mxu0 0.0
        %728 = vmatprep.subr.mxu0 0.0
        %729 = vmatpush1.msra.mxu0 0.0
        %730 = vmatprep.subr.mxu0 0.0
        %731 = vmatpush1.msra.mxu0 0.0
        %732 = vmatprep.subr.mxu0 0.0
        %733 = vmatpush1.msra.mxu0 0.0
        %734 = vmatprep.subr.mxu0 0.0
        %735 = vmatpush1.msra.mxu0 0.0
        %736 = vmatprep.subr.mxu0 0.0
        %737 = vmatpush1.msra.mxu0 0.0
        %738 = vmatprep.subr.mxu0 0.0
        %739 = vmatpush1.msra.mxu0 0.0
        %740 = vmatprep.subr.mxu0 0.0
        %741 = vmatpush1.msra.mxu0 0.0
        %742 = vmatprep.subr.mxu0 0.0
        %743 = vmatpush1.msra.mxu0 0.0
        %744 = vmatprep.subr.mxu0 0.0
        %745 = vmatpush1.msra.mxu0 0.0
        %746 = vmatprep.subr.mxu0 0.0
        %747 = vmatpush1.msra.mxu0 0.0
        %748 = vmatprep.subr.mxu0 0.0
        %749 = vmatpush1.msra.mxu0 0.0
        %750 = vmatprep.subr.mxu0 0.0
        %751 = vmatpush1.msra.mxu0 0.0
        %752 = vmatprep.subr.mxu0 0.0
        %753 = vmatpush1.msra.mxu0 0.0
        %754 = vmatprep.subr.mxu0 0.0
        %755 = vmatpush1.msra.mxu0 0.0
        %756 = vmatprep.subr.mxu0 0.0
        %757 = vmatpush1.msra.mxu0 0.0
        %758 = vmatprep.subr.mxu0 0.0
        %759 = vmatpush1.msra.mxu0 0.0
        %760 = vmatprep.subr.mxu0 0.0
        %761 = vmatpush1.msra.mxu0 0.0
        %762 = vmatprep.subr.mxu0 0.0
        %763 = vmatpush1.msra.mxu0 0.0
        %764 = vmatprep.subr.mxu0 0.0
        %765 = vmatpush1.msra.mxu0 0.0
        %766 = vmatprep.subr.mxu0 0.0
        %767 = vmatpush1.msra.mxu0 0.0
        %768 = vmatprep.subr.mxu0 0.0
        %769 = vmatpush1.msra.mxu0 0.0
        %770 = vmatprep.subr.mxu0 0.0
        %771 = vmatpush1.msra.mxu0 0.0
        %772 = vmatprep.subr.mxu0 0.0
        %773 = vmatpush1.msra.mxu0 0.0
        %774 = vmatprep.subr.mxu0 0.0
        %775 = vmatpush1.msra.mxu0 0.0
        %776 = vmatprep.subr.mxu0 0.0
        %777 = vmatpush1.msra.mxu0 0.0
        %778 = vmatprep.subr.mxu0 0.0
        %779 = vmatpush1.msra.mxu0 0.0
        %780 = vmatprep.mubr.f32.mxu0 0.0
        %v781 = vand.u32 %v180, 4294901760
        %782 = vmatmul.mubr.f32.gmra.mrb[0].mxu0 %v781
        %v783 = vpop.f32.mrb[0].mxu0
        %v784 = vadd.f32 %v691, %v783
        %v785 = vpop.f32.mrb[0].mxu0
        %786 = vmatprep.mubr.f32.mxu0 0.0
        %v787 = vand.u32 %v183, 4294901760
        %788 = vmatmul.mubr.f32.gmra.mrb[0].mxu0 %v787
        %v789 = vpop.f32.mrb[0].mxu0
        %v790 = vadd.f32 %v697, %v789
        %v791 = vpop.f32.mrb[0].mxu0
        %792 = vmatprep.mubr.f32.mxu0 0.0
        %v793 = vand.u32 %v186, 4294901760
        %794 = vmatmul.mubr.f32.gmra.mrb[0].mxu0 %v793
        %v795 = vpop.f32.mrb[0].mxu0
        %v796 = vadd.f32 %v703, %v795
        %v797 = vpop.f32.mrb[0].mxu0
        %798 = vmatprep.mubr.f32.mxu0 0.0
        %v799 = vand.u32 %v189, 4294901760
        %800 = vmatmul.mubr.f32.gmra.mrb[0].mxu0 %v799
        %v801 = vpop.f32.mrb[0].mxu0
        %v802 = vadd.f32 %v709, %v801
        %v803 = vpop.f32.mrb[0].mxu0
        %804 = vdwg.mxu0
        %805 = vst.msk [vmem:[%s163] sm:$0xff] %vm169, %v784
        %806 = vst.msk [vmem:[%s163 + $0x8] sm:$0xff] %vm169, %v790
        %807 = vst.msk [vmem:[%s163 + $0x10] sm:$0xff] %vm169, %v796
        %808 = vst.msk [vmem:[%s163 + $0x18] sm:$0xff] %vm169, %v802
        %p809 = scmp.lt.s32.totalorder %s16, 1
        %s810 = scalar_select %p809, %s16, 1
        %s811 = smul.addr %s810, 8
        %s812 = smul.addr %s811, 8
        %s813 = scalar_lea.vmem %s2, %s812
        // Predicated region
        $region33: #{tpu_custom_call.1} parent=27 // pred_check
          %p814 = pneg %p81
        $region34: #{tpu_custom_call.1} parent=27 // pred_check_branch
          %816 = sbr.rel (%p814) target = $region36
        $region35: #{tpu_custom_call.1} parent=27 // pred_region
          _
        $region36: #{tpu_custom_call.1} parent=27 // pred_fallthru
          _
      $region28: #{tpu_custom_call.1} parent=5 // pred_fallthru
        _
      %p817 = scmp.le.s32.totalorder 2, %s11
      // Predicated region
      $region37: #{tpu_custom_call.1} parent=5 // pred_check
        %p818 = pneg %p817
      $region38: #{tpu_custom_call.1} parent=5 // pred_check_branch
        %820 = sbr.rel (%p818) target = $region40
      $region39: #{tpu_custom_call.1} parent=5 // pred_region
        %s821 = ssub.s32 %s11, 2
        // Predicated region
        $region41: #{tpu_custom_call.1} parent=39 // pred_check
          %p822 = pneg %p87
        $region42: #{tpu_custom_call.1} parent=39 // pred_check_branch
          %824 = sbr.rel (%p822) target = $region44
        $region43: #{tpu_custom_call.1} parent=39 // pred_region
          %p825 = scmp.lt.s32.totalorder %s17, 1
          %s826 = scalar_select %p825, %s17, 1
          %s827 = smul.addr %s826, 8
          %s828 = smul.addr %s827, 8
          %s829 = scalar_lea.vmem %s2, %s828
        $region44: #{tpu_custom_call.1} parent=39 // pred_fallthru
          _
      $region40: #{tpu_custom_call.1} parent=5 // pred_fallthru
        _
    $region6: #{tpu_custom_call.1} parent=1 // loop_footer
      %s15 = sadd.s32 1, %s11
    $region7: #{tpu_custom_call.1} parent=1 // loop_footer_branch
      %10 = sbr.rel target = $region3
    $region8: #{tpu_custom_call.1} parent=1 // loop_exit
      _
    %830 = vsyncpa [#allocation3], 1
    %s831 = scalar_lea.sflag [#allocation3], 1
    %832 = vsyncpa %s831, 1

</llo_original>
